<compile_context>
chip_gen: v7x
topology: tpu7x:2x2x1
jax: 0.10.0
libtpu: 0.0.40
codegen_flags: <defaults>
</compile_context>

<pallas_src>
import functools

import jax
import jax.numpy as jnp
from jax.experimental import pallas as pl
from jax.experimental.pallas import tpu as pltpu

_LANES = 128
_SUBLANES = 8


def _round_up(v, m):
    return ((v + m - 1) // m) * m


def _embedding_kernel(x_ref, o_ref, *, freq_bands, use_recurrence):
    """x_ref: (tb, 128);  o_ref: (2*N_freqs+1, tb, 128).

    o_ref[0]       = x
    o_ref[2k + 1]  = sin(f_k * x)
    o_ref[2k + 2]  = cos(f_k * x)
    """
    x_in = x_ref[...]
    # Passthrough slab: no pointless f32 round-trip, no cast if dtypes match.
    o_ref[0] = x_in if x_in.dtype == o_ref.dtype else x_in.astype(o_ref.dtype)
    if not freq_bands:
        return

    # f32 in-register math even for bf16 inputs / bf16 outputs.
    x = x_in if x_in.dtype == jnp.float32 else x_in.astype(jnp.float32)

    def store(k, s, c):
        o_ref[2 * k + 1] = s if s.dtype == o_ref.dtype else s.astype(o_ref.dtype)
        o_ref[2 * k + 2] = c if c.dtype == o_ref.dtype else c.astype(o_ref.dtype)

    if use_recurrence:
        # Bands are an exact geometric sequence with ratio 2 (logscale=True):
        # sin(2t) = 2*s*c,  cos(2t) = 1 - 2*s^2  -> only 2 transcendentals total.
        f0 = freq_bands[0]
        t = x if f0 == 1.0 else x * f0
        s = jnp.sin(t)
        c = jnp.cos(t)
        n = len(freq_bands)
        for k in range(n):
            store(k, s, c)
            if k + 1 < n:
                s, c = 2.0 * s * c, 1.0 - 2.0 * s * s
    else:
        for k, f in enumerate(freq_bands):
            t = x * f
            store(k, jnp.sin(t), jnp.cos(t))


class Embedding:
    """JAX/Pallas port of the sfdm positional-encoding Embedding module."""

    def __init__(self, in_channels, N_freqs, logscale=True, *,
                 out_dtype=None,
                 use_recurrence=None,
                 block_rows=2048,
                 vmem_budget_bytes=20 * 1024 * 1024,
                 vmem_limit_bytes=32 * 1024 * 1024):
        self.N_freqs = N_freqs
        self.in_channels = in_channels
        self.n_slabs = 2 * N_freqs + 1
        self.out_channels = in_channels * self.n_slabs
        # out_dtype=None keeps the input dtype (PyTorch semantics).  Passing
        # jnp.bfloat16 halves the dominant HBM writeback (~1.7-1.9x end-to-end
        # on memory-bound v5e/v6e); fine for features feeding an MLP.
        self.out_dtype = None if out_dtype is None else jnp.dtype(out_dtype)
        self.block_rows = int(block_rows)
        self.vmem_budget_bytes = int(vmem_budget_bytes)
        self.vmem_limit_bytes = int(vmem_limit_bytes)

        if logscale:
            freqs = 2.0 ** jnp.linspace(0.0, N_freqs - 1, N_freqs)
        else:
            freqs = jnp.linspace(1.0, 2.0 ** (N_freqs - 1), N_freqs)
        # Static python floats -> kernel fully unrolls with constants.
        self.freq_bands = tuple(float(f) for f in freqs)

        # Double-angle recurrence is only valid for an exact ratio-2 geometric
        # sequence of bands (always true for logscale=True).
        geometric = all(
            self.freq_bands[k + 1] == 2.0 * self.freq_bands[k]
            for k in range(len(self.freq_bands) - 1)
        )
        if use_recurrence is None:
            use_recurrence = logscale
        self.use_recurrence = bool(use_recurrence) and geometric and N_freqs > 0

        # jit so the pad / slice / transpose plumbing fuses with the kernel call.
        self._embed = jax.jit(self._embed_impl, static_argnames=("interleave",))

    # ------------------------------------------------------------------ #

    def _embed_impl(self, x, *, interleave=True):
        B, C = x.shape
        assert C == self.in_channels, (C, self.in_channels)
        n_slabs = self.n_slabs
        out_dtype = x.dtype if self.out_dtype is None else self.out_dtype

        total = B * C
        rows = pl.cdiv(total, _LANES)
        rows8 = max(_SUBLANES, _round_up(rows, _SUBLANES))

        # Tile rows: large enough to amortize the ~0.35 us/step overhead,
        # small enough that the double-buffered (input + 13-slab output)
        # working set fits the VMEM budget.  Uses the actual in/out itemsizes.
        in_item = jnp.dtype(x.dtype).itemsize
        out_item = jnp.dtype(out_dtype).itemsize
        row_bytes = _LANES * (in_item + n_slabs * out_item)
        tb_cap = max(_SUBLANES,
                     (self.vmem_budget_bytes // (2 * row_bytes))
                     // _SUBLANES * _SUBLANES)

        tb = min(self.block_rows, tb_cap, rows8)
        if rows8 > _SUBLANES:
            # Guarantee grid >= 2 so ("parallel",) can shard across both
            # TensorCores on v7x megacore.
            tb = min(tb, _round_up(pl.cdiv(rows8, 2), _SUBLANES))
        tb = max(_SUBLANES, (tb // _SUBLANES) * _SUBLANES)

        grid = pl.cdiv(rows8, tb)
        rows_padded = grid * tb

        # Flatten + pad to a lane-dense (rows_padded, 128) slab.  Padding only
        # happens when B*C is ragged w.r.t. the tile; it costs one extra pass
        # over the (small, 1/13-sized) input.
        x_flat = x.reshape(-1)
        pad = rows_padded * _LANES - total
        if pad:
            x_flat = jnp.pad(x_flat, (0, pad))
        x2d = x_flat.reshape(rows_padded, _LANES)

        kernel = functools.partial(
            _embedding_kernel,
            freq_bands=self.freq_bands,
            use_recurrence=self.use_recurrence,
        )

        slab = pl.pallas_call(
            kernel,
            out_shape=jax.ShapeDtypeStruct((n_slabs, rows_padded, _LANES),
                                           out_dtype),
            grid_spec=pltpu.PrefetchScalarGridSpec(
                num_scalar_prefetch=0,
                grid=(grid,),
                in_specs=[pl.BlockSpec((tb, _LANES), lambda i: (i, 0))],
                out_specs=pl.BlockSpec((n_slabs, tb, _LANES),
                                       lambda i: (0, i, 0)),
            ),
            compiler_params=pltpu.CompilerParams(
                dimension_semantics=("parallel",),
                vmem_limit_bytes=self.vmem_limit_bytes,
            ),
        )(x2d)

        out = slab.reshape(n_slabs, rows_padded * _LANES)
        if pad:
            out = out[:, :total]
        out = out.reshape(n_slabs, B, C)

        if not interleave:
            # Slab-major layout (n_slabs, B, C): skips the extra HBM pass of
            # the channel-interleave transpose; downstream consumers can fold
            # the permutation into their first Linear's weights.
            return out

        # TODO(synk): the channel-interleave below is one fused XLA transpose
        # (an extra HBM pass over the 13x output); fusing it into the kernel
        # would need a coprime 39-vs-128 lane shuffle, so it is left to XLA.
        return out.transpose(1, 0, 2).reshape(B, self.out_channels)

    # ------------------------------------------------------------------ #

    def __call__(self, x, interleave=True):
        """x: (B, in_channels).

        interleave=True  -> (B, out_channels), PyTorch layout
                            [x | sin(f0 x) | cos(f0 x) | sin(f1 x) | ...].
        interleave=False -> (2*N_freqs+1, B, in_channels) slab-major layout
                            (no output transpose; fastest path).
        """
        return self._embed(x, interleave=interleave)


def _reference(x, freq_bands):
    out = [x]
    for f in freq_bands:
        out.append(jnp.sin(f * x))
        out.append(jnp.cos(f * x))
    return jnp.concatenate(out, axis=-1)


if __name__ == "__main__":
    key = jax.random.PRNGKey(0)
    B, C, N_freqs = 16, 3, 6   # xyz coordinates, 6 frequency bands
    x = jax.random.normal(key, (B, C), dtype=jnp.float32)

    emb = Embedding(in_channels=C, N_freqs=N_freqs, logscale=True)
    out = jax.block_until_ready(emb(x))
    ref = _reference(x, emb.freq_bands)
    assert out.shape == (B, emb.out_channels), out.shape
    # double-angle recurrence: allow a few ulps of compounding at the top band
    assert jnp.allclose(out, ref, atol=1e-4, rtol=1e-4), "mismatch vs reference"

    # padding path (B*C not a multiple of 128)
    x2 = jax.random.normal(jax.random.PRNGKey(1), (37, C), dtype=jnp.float32)
    out2 = jax.block_until_ready(emb(x2))
    ref2 = _reference(x2, emb.freq_bands)
    assert out2.shape == (37, emb.out_channels), out2.shape
    assert jnp.allclose(out2, ref2, atol=1e-4, rtol=1e-4), "mismatch (padded)"

    # transpose-free slab-major path
    slab = jax.block_until_ready(emb(x, interleave=False))
    assert slab.shape == (emb.n_slabs, B, C), slab.shape
    assert jnp.allclose(slab.transpose(1, 0, 2).reshape(B, -1), ref,
                        atol=1e-4, rtol=1e-4), "mismatch (slab-major)"

    # bf16 output option (halves HBM writeback; compute stays f32 in-register)
    emb_bf16 = Embedding(in_channels=C, N_freqs=N_freqs, logscale=True,
                         out_dtype=jnp.bfloat16)
    out3 = jax.block_until_ready(emb_bf16(x))
    assert out3.dtype == jnp.bfloat16
    assert jnp.allclose(out3.astype(jnp.float32), ref, atol=2e-2, rtol=2e-2), \
        "mismatch (bf16 output)"

    # non-logscale bands -> direct sin/cos path (no recurrence)
    emb_lin = Embedding(in_channels=C, N_freqs=N_freqs, logscale=False)
    out4 = jax.block_until_ready(emb_lin(x))
    ref4 = _reference(x, emb_lin.freq_bands)
    assert jnp.allclose(out4, ref4, atol=1e-5, rtol=1e-5), "mismatch (linear bands)"

    print("KERNEL_OK")
</pallas_src>

<mosaic_0001>
module attributes {stable_mosaic.version = 11 : i64} {
  func.func @_embedding_kernel(%arg0: i32, %arg1: memref<8x128xf32, #tpu.memory_space<vmem>>, %arg2: memref<13x8x128xf32, #tpu.memory_space<vmem>>) attributes {dimension_semantics = [#tpu.dimension_semantics<parallel>], iteration_bounds = array<i64: 1>, scalar_prefetch = 0 : i64, scratch_operands = 0 : i64, tpu.core_type = #tpu.core_type<tc>, window_params = [{transform_indices = @transform_0, window_bounds = array<i64: 8, 128>}, {transform_indices = @transform_1, window_bounds = array<i64: 13, 8, 128>}]} {
    %c0 = arith.constant 0 : index
    %c0_0 = arith.constant 0 : index
    %0 = vector.load %arg1[%c0, %c0_0] : memref<8x128xf32, #tpu.memory_space<vmem>>, vector<8x128xf32>
    %c0_1 = arith.constant 0 : index
    %c0_2 = arith.constant 0 : index
    %c0_3 = arith.constant 0 : index
    %1 = vector.load %arg2[%c0_1, %c0_2, %c0_3] : memref<13x8x128xf32, #tpu.memory_space<vmem>>, vector<1x8x128xf32>
    %2 = vector.shape_cast %1 : vector<1x8x128xf32> to vector<8x128xf32>
    %3 = vector.shape_cast %0 : vector<8x128xf32> to vector<1x8x128xf32>
    tpu.vector_store %arg2[%c0_1, %c0_2, %c0_3], %3 {strides = array<i32>} : memref<13x8x128xf32, #tpu.memory_space<vmem>>, vector<1x8x128xf32>,
    %4 = math.sin %0 : vector<8x128xf32>
    %5 = math.cos %0 : vector<8x128xf32>
    %c1 = arith.constant 1 : index
    %c0_4 = arith.constant 0 : index
    %c0_5 = arith.constant 0 : index
    %6 = vector.load %arg2[%c1, %c0_4, %c0_5] : memref<13x8x128xf32, #tpu.memory_space<vmem>>, vector<1x8x128xf32>
    %7 = vector.shape_cast %6 : vector<1x8x128xf32> to vector<8x128xf32>
    %8 = vector.shape_cast %4 : vector<8x128xf32> to vector<1x8x128xf32>
    tpu.vector_store %arg2[%c1, %c0_4, %c0_5], %8 {strides = array<i32>} : memref<13x8x128xf32, #tpu.memory_space<vmem>>, vector<1x8x128xf32>,
    %c2 = arith.constant 2 : index
    %c0_6 = arith.constant 0 : index
    %c0_7 = arith.constant 0 : index
    %9 = vector.load %arg2[%c2, %c0_6, %c0_7] : memref<13x8x128xf32, #tpu.memory_space<vmem>>, vector<1x8x128xf32>
    %10 = vector.shape_cast %9 : vector<1x8x128xf32> to vector<8x128xf32>
    %11 = vector.shape_cast %5 : vector<8x128xf32> to vector<1x8x128xf32>
    tpu.vector_store %arg2[%c2, %c0_6, %c0_7], %11 {strides = array<i32>} : memref<13x8x128xf32, #tpu.memory_space<vmem>>, vector<1x8x128xf32>,
    %cst = arith.constant 2.000000e+00 : f32
    %12 = vector.broadcast %cst : f32 to vector<8x128xf32>
    %13 = arith.mulf %12, %4 : vector<8x128xf32>
    %14 = arith.mulf %13, %5 : vector<8x128xf32>
    %cst_8 = arith.constant 2.000000e+00 : f32
    %15 = vector.broadcast %cst_8 : f32 to vector<8x128xf32>
    %16 = arith.mulf %15, %4 : vector<8x128xf32>
    %17 = arith.mulf %16, %4 : vector<8x128xf32>
    %cst_9 = arith.constant 1.000000e+00 : f32
    %18 = vector.broadcast %cst_9 : f32 to vector<8x128xf32>
    %19 = arith.subf %18, %17 : vector<8x128xf32>
    %c3 = arith.constant 3 : index
    %c0_10 = arith.constant 0 : index
    %c0_11 = arith.constant 0 : index
    %20 = vector.load %arg2[%c3, %c0_10, %c0_11] : memref<13x8x128xf32, #tpu.memory_space<vmem>>, vector<1x8x128xf32>
    %21 = vector.shape_cast %20 : vector<1x8x128xf32> to vector<8x128xf32>
    %22 = vector.shape_cast %14 : vector<8x128xf32> to vector<1x8x128xf32>
    tpu.vector_store %arg2[%c3, %c0_10, %c0_11], %22 {strides = array<i32>} : memref<13x8x128xf32, #tpu.memory_space<vmem>>, vector<1x8x128xf32>,
    %c4 = arith.constant 4 : index
    %c0_12 = arith.constant 0 : index
    %c0_13 = arith.constant 0 : index
    %23 = vector.load %arg2[%c4, %c0_12, %c0_13] : memref<13x8x128xf32, #tpu.memory_space<vmem>>, vector<1x8x128xf32>
    %24 = vector.shape_cast %23 : vector<1x8x128xf32> to vector<8x128xf32>
    %25 = vector.shape_cast %19 : vector<8x128xf32> to vector<1x8x128xf32>
    tpu.vector_store %arg2[%c4, %c0_12, %c0_13], %25 {strides = array<i32>} : memref<13x8x128xf32, #tpu.memory_space<vmem>>, vector<1x8x128xf32>,
    %cst_14 = arith.constant 2.000000e+00 : f32
    %26 = vector.broadcast %cst_14 : f32 to vector<8x128xf32>
    %27 = arith.mulf %26, %14 : vector<8x128xf32>
    %28 = arith.mulf %27, %19 : vector<8x128xf32>
    %cst_15 = arith.constant 2.000000e+00 : f32
    %29 = vector.broadcast %cst_15 : f32 to vector<8x128xf32>
    %30 = arith.mulf %29, %14 : vector<8x128xf32>
    %31 = arith.mulf %30, %14 : vector<8x128xf32>
    %cst_16 = arith.constant 1.000000e+00 : f32
    %32 = vector.broadcast %cst_16 : f32 to vector<8x128xf32>
    %33 = arith.subf %32, %31 : vector<8x128xf32>
    %c5 = arith.constant 5 : index
    %c0_17 = arith.constant 0 : index
    %c0_18 = arith.constant 0 : index
    %34 = vector.load %arg2[%c5, %c0_17, %c0_18] : memref<13x8x128xf32, #tpu.memory_space<vmem>>, vector<1x8x128xf32>
    %35 = vector.shape_cast %34 : vector<1x8x128xf32> to vector<8x128xf32>
    %36 = vector.shape_cast %28 : vector<8x128xf32> to vector<1x8x128xf32>
    tpu.vector_store %arg2[%c5, %c0_17, %c0_18], %36 {strides = array<i32>} : memref<13x8x128xf32, #tpu.memory_space<vmem>>, vector<1x8x128xf32>,
    %c6 = arith.constant 6 : index
    %c0_19 = arith.constant 0 : index
    %c0_20 = arith.constant 0 : index
    %37 = vector.load %arg2[%c6, %c0_19, %c0_20] : memref<13x8x128xf32, #tpu.memory_space<vmem>>, vector<1x8x128xf32>
    %38 = vector.shape_cast %37 : vector<1x8x128xf32> to vector<8x128xf32>
    %39 = vector.shape_cast %33 : vector<8x128xf32> to vector<1x8x128xf32>
    tpu.vector_store %arg2[%c6, %c0_19, %c0_20], %39 {strides = array<i32>} : memref<13x8x128xf32, #tpu.memory_space<vmem>>, vector<1x8x128xf32>,
    %cst_21 = arith.constant 2.000000e+00 : f32
    %40 = vector.broadcast %cst_21 : f32 to vector<8x128xf32>
    %41 = arith.mulf %40, %28 : vector<8x128xf32>
    %42 = arith.mulf %41, %33 : vector<8x128xf32>
    %cst_22 = arith.constant 2.000000e+00 : f32
    %43 = vector.broadcast %cst_22 : f32 to vector<8x128xf32>
    %44 = arith.mulf %43, %28 : vector<8x128xf32>
    %45 = arith.mulf %44, %28 : vector<8x128xf32>
    %cst_23 = arith.constant 1.000000e+00 : f32
    %46 = vector.broadcast %cst_23 : f32 to vector<8x128xf32>
    %47 = arith.subf %46, %45 : vector<8x128xf32>
    %c7 = arith.constant 7 : index
    %c0_24 = arith.constant 0 : index
    %c0_25 = arith.constant 0 : index
    %48 = vector.load %arg2[%c7, %c0_24, %c0_25] : memref<13x8x128xf32, #tpu.memory_space<vmem>>, vector<1x8x128xf32>
    %49 = vector.shape_cast %48 : vector<1x8x128xf32> to vector<8x128xf32>
    %50 = vector.shape_cast %42 : vector<8x128xf32> to vector<1x8x128xf32>
    tpu.vector_store %arg2[%c7, %c0_24, %c0_25], %50 {strides = array<i32>} : memref<13x8x128xf32, #tpu.memory_space<vmem>>, vector<1x8x128xf32>,
    %c8 = arith.constant 8 : index
    %c0_26 = arith.constant 0 : index
    %c0_27 = arith.constant 0 : index
    %51 = vector.load %arg2[%c8, %c0_26, %c0_27] : memref<13x8x128xf32, #tpu.memory_space<vmem>>, vector<1x8x128xf32>
    %52 = vector.shape_cast %51 : vector<1x8x128xf32> to vector<8x128xf32>
    %53 = vector.shape_cast %47 : vector<8x128xf32> to vector<1x8x128xf32>
    tpu.vector_store %arg2[%c8, %c0_26, %c0_27], %53 {strides = array<i32>} : memref<13x8x128xf32, #tpu.memory_space<vmem>>, vector<1x8x128xf32>,
    %cst_28 = arith.constant 2.000000e+00 : f32
    %54 = vector.broadcast %cst_28 : f32 to vector<8x128xf32>
    %55 = arith.mulf %54, %42 : vector<8x128xf32>
    %56 = arith.mulf %55, %47 : vector<8x128xf32>
    %cst_29 = arith.constant 2.000000e+00 : f32
    %57 = vector.broadcast %cst_29 : f32 to vector<8x128xf32>
    %58 = arith.mulf %57, %42 : vector<8x128xf32>
    %59 = arith.mulf %58, %42 : vector<8x128xf32>
    %cst_30 = arith.constant 1.000000e+00 : f32
    %60 = vector.broadcast %cst_30 : f32 to vector<8x128xf32>
    %61 = arith.subf %60, %59 : vector<8x128xf32>
    %c9 = arith.constant 9 : index
    %c0_31 = arith.constant 0 : index
    %c0_32 = arith.constant 0 : index
    %62 = vector.load %arg2[%c9, %c0_31, %c0_32] : memref<13x8x128xf32, #tpu.memory_space<vmem>>, vector<1x8x128xf32>
    %63 = vector.shape_cast %62 : vector<1x8x128xf32> to vector<8x128xf32>
    %64 = vector.shape_cast %56 : vector<8x128xf32> to vector<1x8x128xf32>
    tpu.vector_store %arg2[%c9, %c0_31, %c0_32], %64 {strides = array<i32>} : memref<13x8x128xf32, #tpu.memory_space<vmem>>, vector<1x8x128xf32>,
    %c10 = arith.constant 10 : index
    %c0_33 = arith.constant 0 : index
    %c0_34 = arith.constant 0 : index
    %65 = vector.load %arg2[%c10, %c0_33, %c0_34] : memref<13x8x128xf32, #tpu.memory_space<vmem>>, vector<1x8x128xf32>
    %66 = vector.shape_cast %65 : vector<1x8x128xf32> to vector<8x128xf32>
    %67 = vector.shape_cast %61 : vector<8x128xf32> to vector<1x8x128xf32>
    tpu.vector_store %arg2[%c10, %c0_33, %c0_34], %67 {strides = array<i32>} : memref<13x8x128xf32, #tpu.memory_space<vmem>>, vector<1x8x128xf32>,
    %cst_35 = arith.constant 2.000000e+00 : f32
    %68 = vector.broadcast %cst_35 : f32 to vector<8x128xf32>
    %69 = arith.mulf %68, %56 : vector<8x128xf32>
    %70 = arith.mulf %69, %61 : vector<8x128xf32>
    %cst_36 = arith.constant 2.000000e+00 : f32
    %71 = vector.broadcast %cst_36 : f32 to vector<8x128xf32>
    %72 = arith.mulf %71, %56 : vector<8x128xf32>
    %73 = arith.mulf %72, %56 : vector<8x128xf32>
    %cst_37 = arith.constant 1.000000e+00 : f32
    %74 = vector.broadcast %cst_37 : f32 to vector<8x128xf32>
    %75 = arith.subf %74, %73 : vector<8x128xf32>
    %c11 = arith.constant 11 : index
    %c0_38 = arith.constant 0 : index
    %c0_39 = arith.constant 0 : index
    %76 = vector.load %arg2[%c11, %c0_38, %c0_39] : memref<13x8x128xf32, #tpu.memory_space<vmem>>, vector<1x8x128xf32>
    %77 = vector.shape_cast %76 : vector<1x8x128xf32> to vector<8x128xf32>
    %78 = vector.shape_cast %70 : vector<8x128xf32> to vector<1x8x128xf32>
    tpu.vector_store %arg2[%c11, %c0_38, %c0_39], %78 {strides = array<i32>} : memref<13x8x128xf32, #tpu.memory_space<vmem>>, vector<1x8x128xf32>,
    %c12 = arith.constant 12 : index
    %c0_40 = arith.constant 0 : index
    %c0_41 = arith.constant 0 : index
    %79 = vector.load %arg2[%c12, %c0_40, %c0_41] : memref<13x8x128xf32, #tpu.memory_space<vmem>>, vector<1x8x128xf32>
    %80 = vector.shape_cast %79 : vector<1x8x128xf32> to vector<8x128xf32>
    %81 = vector.shape_cast %75 : vector<8x128xf32> to vector<1x8x128xf32>
    tpu.vector_store %arg2[%c12, %c0_40, %c0_41], %81 {strides = array<i32>} : memref<13x8x128xf32, #tpu.memory_space<vmem>>, vector<1x8x128xf32>,
    return
  }
  func.func @transform_0(%arg0: i32) -> (i32, i32) {
    %c0_i32 = arith.constant 0 : i32
    %c0_i32_0 = arith.constant 0 : i32
    return %arg0, %c0_i32 : i32, i32
  }
  func.func @transform_1(%arg0: i32) -> (i32, i32, i32) {
    %c0_i32 = arith.constant 0 : i32
    %c0_i32_0 = arith.constant 0 : i32
    %c0_i32_1 = arith.constant 0 : i32
    return %c0_i32, %arg0, %c0_i32_0 : i32, i32, i32
  }
}

</mosaic_0001>

<llo_original>
// kernel: _embed_impl.1
$region0: #{_embed_impl.1}
  #allocation0 [shape = 'u32[]', space=smem, size = 0x4, offset = 0x4, fixed_abs, tag = 'smem constant byte address 0x4 - core index']
  #allocation1 [shape = 'u32[144,128]{1,0:T(1,128)}', space=vmem, size = 0x12000, scoped, tag = 'internal scratch']
  %s0 = inlined_call_operand.vmem [shape: f32[8,128], index: 0, kind: input, shape index: {}]
  %s1 = inlined_call_operand.vmem [shape: f32[13,8,128], index: 1, kind: output, shape index: {}]
  %s2 = sld [smem:[#allocation0]]
  $region14: #{_embed_impl.1} parent=0
    _
  %s4 = ssub.s32 1, %s2
  %s5 = scalar_select 0, %s4, %s2
  // Predicated region
  $region2: #{_embed_impl.1} parent=0 // pred_check
    _
  $region3: #{_embed_impl.1} parent=0 // pred_check_branch
    %7 = sbr.rel (0) target = $region5
  $region4: #{_embed_impl.1} parent=0 // pred_region
    _
  $region5: #{_embed_impl.1} parent=0 // pred_fallthru
    _
  %v8 = vld [vmem:[%s0] sm:$0xff]
  %9 = vst [vmem:[%s1] sm:$0xff] %v8
  %v10 = vand.u32 2147483647, %v8
  %vm11 = vcmp.le.f32.partialorder %v10, 0.7853982
  %vm12 = vcmp.lt.s32.totalorder %v8, 0
  %v13 = vand.u32 %v8, 2139095040
  %v14 = vshrl.u32 %v13, 23
  %v15 = vsub.s32 %v14, 127
  %v16 = vand.u32 2147483647, %v8
  %v17 = vand.u32 %v16, 8388607
  %v18 = vor.u32 %v17, 8388608
  %v19 = vsub.s32 0, %v18
  %v20 = vadd.s32 %v15, 1
  %vm21 = vcmp.gt.s32.totalorder %v20, 0
  %v22 = vsel %vm21, %v20, 0
  %v23 = vshrl.u32 %v22, 5
  %v24 = vand.u32 %v22, 31
  %v25 = vsub.s32 32, %v24
  %v26 = vshrl.u32 683565275, %v25
  %v27 = vshll.u32 683565275, %v24
  %v28 = vshrl.u32 2475754826, %v25
  %v29 = vor.u32 %v27, %v28
  %v30 = vshll.u32 2475754826, %v24
  %v31 = vshrl.u32 2131351028, %v25
  %v32 = vor.u32 %v30, %v31
  %v33 = vshll.u32 2131351028, %v24
  %v34 = vshrl.u32 2102212464, %v25
  %v35 = vor.u32 %v33, %v34
  %v36 = vshll.u32 2102212464, %v24
  %v37 = vshrl.u32 920167782, %v25
  %v38 = vor.u32 %v36, %v37
  %v39 = vshll.u32 920167782, %v24
  %v40 = vshrl.u32 1326507024, %v25
  %v41 = vor.u32 %v39, %v40
  %vm42 = vcmp.lt.s32.totalorder %v23, 1
  %vm43 = vcmp.lt.s32.totalorder %v23, 2
  %vm44 = vcmp.lt.s32.totalorder %v23, 3
  %vm45 = vcmp.lt.s32.totalorder %v23, 4
  %v46 = vsel %vm42, %v26, %v29
  %v47 = vsel %vm45, %v35, 2102212464
  %v48 = vsel %vm44, %v32, %v47
  %v49 = vsel %vm43, %v46, %v48
  %v50 = vsel %vm42, %v29, %v32
  %v51 = vsel %vm45, %v38, 920167782
  %v52 = vsel %vm44, %v35, %v51
  %v53 = vsel %vm43, %v50, %v52
  %v54 = vsel %vm42, %v32, %v35
  %v55 = vsel %vm45, %v41, 1326507024
  %v56 = vsel %vm44, %v38, %v55
  %v57 = vsel %vm43, %v54, %v56
  %v58 = vshll.u32 %v18, 8
  %v59 = vmul.u32.u64.compose %v58, %v57
  %v60 = vextract.low.u32 %v59
  %v61 = vextract.high.u32 %v59
  %v62 = vmul.u32.u64.compose %v58, %v53
  %v63 = vextract.low.u32 %v62
  %v64 = vextract.high.u32 %v62
  %v65 = vmul.u32 %v58, %v49
  %v66 = vadd.s32 %v61, %v63
  %vm67 = vc.u32 %v61, %v63
  %v68 = vadd.s32 %v64, 1
  %v69 = vsel %vm67, %v68, %v64
  %v70 = vadd.s32 %v65, %v69
  %v71 = vadd.s32 %v70, 536870912
  %v72 = vshrl.u32 %v71, 30
  %v73 = vshll.u32 %v72, 30
  %v74 = vsub.s32 %v70, %v73
  %vm75 = vcmp.lt.s32.totalorder %v74, 0
  %v76 = vsub.s32 0, %v74
  %v77 = vsel %vm75, %v76, %v74
  %v78 = vclz %v77
  %v79 = vsub.s32 %v78, 2
  %vm80 = vcmp.gt.s32.totalorder 0, %v79
  %v81 = vsel %vm80, 0, %v79
  %v82 = vsub.s32 32, %v81
  %v83 = vshll.u32 %v74, %v81
  %v84 = vshrl.u32 %v66, %v82
  %v85 = vor.u32 %v83, %v84
  %v86 = vsub.s32 4294967266, %v81
  %v87 = vadd.s32 %v86, 127
  %v88 = vshll.u32 %v87, 23
  %v89 = vor.u32 4788187, %v88
  %v90 = vand.u32 2147483647, %v89
  %v92 = vcvt.s32.f32 %v85
  %v93 = vmul.f32 %v92, %v90
  %v94 = vxor.u32 %v93, 2147483648
  %v95 = vsel %vm12, %v94, %v93
  %v96 = vsub.s32 4, %v72
  %v97 = vsel %vm12, %v96, %v72
  %v98 = vsel %vm11, %v8, %v95
  %v99 = vsel %vm11, 0, %v97
  %v100 = vcosq.f32.pop %v98
  %v101 = vsinq.f32.pop %v98
  %vm102 = vweird.f32 %v8
  %v103 = vadd.s32 %v99, 3
  %v104 = vand.u32 %v103, 3
  %vm105 = vcmp.lt.s32.totalorder %v104, 2
  %vm106 = vcmp.eq.s32.totalorder %v104, 0
  %v107 = vxor.u32 %v101, 2147483648
  %v108 = vsel %vm106, %v100, %v107
  %vm109 = vcmp.eq.s32.totalorder %v104, 2
  %v110 = vxor.u32 %v100, 2147483648
  %v111 = vsel %vm109, %v110, %v101
  %v112 = vsel %vm105, %v108, %v111
  %v113 = vsel %vm102, nan, %v112
  %v114 = vand.u32 2147483647, %v8
  %vm115 = vcmp.le.f32.partialorder %v114, 0.7853982
  %vm116 = vcmp.lt.s32.totalorder %v8, 0
  %v117 = vand.u32 %v8, 2139095040
  %v118 = vshrl.u32 %v117, 23
  %v119 = vsub.s32 %v118, 127
  %v120 = vand.u32 2147483647, %v8
  %v121 = vand.u32 %v120, 8388607
  %v122 = vor.u32 %v121, 8388608
  %v123 = vsub.s32 0, %v122
  %v124 = vadd.s32 %v119, 1
  %vm125 = vcmp.gt.s32.totalorder %v124, 0
  %v126 = vsel %vm125, %v124, 0
  %v127 = vshrl.u32 %v126, 5
  %v128 = vand.u32 %v126, 31
  %v129 = vsub.s32 32, %v128
  %v130 = vshrl.u32 683565275, %v129
  %v131 = vshll.u32 683565275, %v128
  %v132 = vshrl.u32 2475754826, %v129
  %v133 = vor.u32 %v131, %v132
  %v134 = vshll.u32 2475754826, %v128
  %v135 = vshrl.u32 2131351028, %v129
  %v136 = vor.u32 %v134, %v135
  %v137 = vshll.u32 2131351028, %v128
  %v138 = vshrl.u32 2102212464, %v129
  %v139 = vor.u32 %v137, %v138
  %v140 = vshll.u32 2102212464, %v128
  %v141 = vshrl.u32 920167782, %v129
  %v142 = vor.u32 %v140, %v141
  %v143 = vshll.u32 920167782, %v128
  %v144 = vshrl.u32 1326507024, %v129
  %v145 = vor.u32 %v143, %v144
  %vm146 = vcmp.lt.s32.totalorder %v127, 1
  %vm147 = vcmp.lt.s32.totalorder %v127, 2
  %vm148 = vcmp.lt.s32.totalorder %v127, 3
  %vm149 = vcmp.lt.s32.totalorder %v127, 4
  %v150 = vsel %vm146, %v130, %v133
  %v151 = vsel %vm149, %v139, 2102212464
  %v152 = vsel %vm148, %v136, %v151
  %v153 = vsel %vm147, %v150, %v152
  %v154 = vsel %vm146, %v133, %v136
  %v155 = vsel %vm149, %v142, 920167782
  %v156 = vsel %vm148, %v139, %v155
  %v157 = vsel %vm147, %v154, %v156
  %v158 = vsel %vm146, %v136, %v139
  %v159 = vsel %vm149, %v145, 1326507024
  %v160 = vsel %vm148, %v142, %v159
  %v161 = vsel %vm147, %v158, %v160
  %v162 = vshll.u32 %v122, 8
  %v163 = vmul.u32.u64.compose %v162, %v161
  %v164 = vextract.low.u32 %v163
  %v165 = vextract.high.u32 %v163
  %v166 = vmul.u32.u64.compose %v162, %v157
  %v167 = vextract.low.u32 %v166
  %v168 = vextract.high.u32 %v166
  %v169 = vmul.u32 %v162, %v153
  %v170 = vadd.s32 %v165, %v167
  %vm171 = vc.u32 %v165, %v167
  %v172 = vadd.s32 %v168, 1
  %v173 = vsel %vm171, %v172, %v168
  %v174 = vadd.s32 %v169, %v173
  %v175 = vadd.s32 %v174, 536870912
  %v176 = vshrl.u32 %v175, 30
  %v177 = vshll.u32 %v176, 30
  %v178 = vsub.s32 %v174, %v177
  %vm179 = vcmp.lt.s32.totalorder %v178, 0
  %v180 = vsub.s32 0, %v178
  %v181 = vsel %vm179, %v180, %v178
  %v182 = vclz %v181
  %v183 = vsub.s32 %v182, 2
  %vm184 = vcmp.gt.s32.totalorder 0, %v183
  %v185 = vsel %vm184, 0, %v183
  %v186 = vsub.s32 32, %v185
  %v187 = vshll.u32 %v178, %v185
  %v188 = vshrl.u32 %v170, %v186
  %v189 = vor.u32 %v187, %v188
  %v190 = vsub.s32 4294967266, %v185
  %v191 = vadd.s32 %v190, 127
  %v192 = vshll.u32 %v191, 23
  %v193 = vor.u32 4788187, %v192
  %v194 = vand.u32 2147483647, %v193
  %v196 = vcvt.s32.f32 %v189
  %v197 = vmul.f32 %v196, %v194
  %v198 = vxor.u32 %v197, 2147483648
  %v199 = vsel %vm116, %v198, %v197
  %v200 = vsub.s32 4, %v176
  %v201 = vsel %vm116, %v200, %v176
  %v202 = vsel %vm115, %v8, %v199
  %v203 = vsel %vm115, 0, %v201
  %v204 = vcosq.f32.pop %v202
  %v205 = vsinq.f32.pop %v202
  %vm206 = vweird.f32 %v8
  %v207 = vand.u32 %v203, 3
  %vm208 = vcmp.lt.s32.totalorder %v207, 2
  %vm209 = vcmp.eq.s32.totalorder %v207, 0
  %v210 = vxor.u32 %v205, 2147483648
  %v211 = vsel %vm209, %v204, %v210
  %vm212 = vcmp.eq.s32.totalorder %v207, 2
  %v213 = vxor.u32 %v204, 2147483648
  %v214 = vsel %vm212, %v213, %v205
  %v215 = vsel %vm208, %v211, %v214
  %v216 = vsel %vm206, nan, %v215
  %s217 = scalar_lea.vmem %s1, 8
  %218 = vst [vmem:[%s217] sm:$0xff] %v113
  %s219 = scalar_lea.vmem %s1, 16
  %220 = vst [vmem:[%s219] sm:$0xff] %v216
  %v221 = vmul.f32 %v113, 2.0
  %v222 = vmul.f32 %v221, %v216
  %v223 = vmul.f32 %v221, %v113
  %v224 = vsub.f32 1.0, %v223
  %s225 = scalar_lea.vmem %s1, 24
  %226 = vst [vmem:[%s225] sm:$0xff] %v222
  %s227 = scalar_lea.vmem %s1, 32
  %228 = vst [vmem:[%s227] sm:$0xff] %v224
  %v229 = vmul.f32 %v222, 2.0
  %v230 = vmul.f32 %v229, %v224
  %v231 = vmul.f32 %v229, %v222
  %v232 = vsub.f32 1.0, %v231
  %s233 = scalar_lea.vmem %s1, 40
  %234 = vst [vmem:[%s233] sm:$0xff] %v230
  %s235 = scalar_lea.vmem %s1, 48
  %236 = vst [vmem:[%s235] sm:$0xff] %v232
  %v237 = vmul.f32 %v230, 2.0
  %v238 = vmul.f32 %v237, %v232
  %v239 = vmul.f32 %v237, %v230
  %v240 = vsub.f32 1.0, %v239
  %s241 = scalar_lea.vmem %s1, 56
  %242 = vst [vmem:[%s241] sm:$0xff] %v238
  %s243 = scalar_lea.vmem %s1, 64
  %244 = vst [vmem:[%s243] sm:$0xff] %v240
  %v245 = vmul.f32 %v238, 2.0
  %v246 = vmul.f32 %v245, %v240
  %v247 = vmul.f32 %v245, %v238
  %v248 = vsub.f32 1.0, %v247
  %s249 = scalar_lea.vmem %s1, 72
  %250 = vst [vmem:[%s249] sm:$0xff] %v246
  %s251 = scalar_lea.vmem %s1, 80
  %252 = vst [vmem:[%s251] sm:$0xff] %v248
  %v253 = vmul.f32 %v246, 2.0
  %v254 = vmul.f32 %v253, %v248
  %v255 = vmul.f32 %v253, %v246
  %v256 = vsub.f32 1.0, %v255
  %s257 = scalar_lea.vmem %s1, 88
  %258 = vst [vmem:[%s257] sm:$0xff] %v254
  %s259 = scalar_lea.vmem %s1, 96
  %260 = vst [vmem:[%s259] sm:$0xff] %v256
  // Predicated region
  $region6: #{_embed_impl.1} parent=0 // pred_check
    _
  $region7: #{_embed_impl.1} parent=0 // pred_check_branch
    %262 = sbr.rel (0) target = $region9
  $region8: #{_embed_impl.1} parent=0 // pred_region
    _
  $region9: #{_embed_impl.1} parent=0 // pred_fallthru
    _
  // Predicated region
  $region10: #{_embed_impl.1} parent=0 // pred_check
    _
  $region11: #{_embed_impl.1} parent=0 // pred_check_branch
    %264 = sbr.rel (0) target = $region13
  $region12: #{_embed_impl.1} parent=0 // pred_region
    _
  $region13: #{_embed_impl.1} parent=0 // pred_fallthru
    _

</llo_original>
